<compile_context>
chip_gen: v5e
topology: v5e:2x2
jax: 0.10.0
libtpu: 0.0.40
codegen_flags: <defaults>
</compile_context>

<pallas_src>
import jax
import jax.numpy as jnp
from jax.experimental import pallas as pl
from jax.experimental.pallas import tpu as pltpu


HIDDEN = 128


def _round_up(x: int, m: int) -> int:
    return ((x + m - 1) // m) * m


def _pick_batch_tile(batch: int, in_dim: int, hidden: int, n_actions: int) -> int:
    """Pick a batch tile that amortizes per-step grid overhead but fits in VMEM."""
    try:
        info = pltpu.get_tpu_info()
        vmem_bytes = int(getattr(info, "vmem_capacity_bytes", 64 * 1024 * 1024))
    except Exception:  # interpret mode / unknown chip
        vmem_bytes = 64 * 1024 * 1024
    # Conservative budget: leaves room for weights, compiler scratch, and the
    # default scoped-VMEM limit being lower than physical capacity.
    budget = vmem_bytes // 8
    # VMEM bytes per batch row: bf16 input (double-buffered) + f32 output
    # (double-buffered) + f32 hidden activation + its bf16 copy.
    per_row = 2 * 2 * in_dim + 2 * 4 * n_actions + 4 * hidden + 2 * hidden
    tb = budget // max(per_row, 1)
    tb = max(8, min(4096, (tb // 8) * 8))
    # never pad a small batch up to a huge tile
    return min(tb, _round_up(max(batch, 1), 8))


def _dqn_fwd_kernel(x_ref, w1_ref, b1_ref, w2_ref, b2_ref, out_ref):
    # One batch tile: relu(x @ W1 + b1) @ W2 + b2, fully fused.
    # bf16 MXU operands, f32 accumulation, f32 elementwise epilogue.
    h = jnp.dot(x_ref[...], w1_ref[...],
                preferred_element_type=jnp.float32)          # (TB, H) f32
    h = jnp.maximum(h + b1_ref[...], 0.0)                    # bias + ReLU in f32
    a = jnp.dot(h.astype(jnp.bfloat16), w2_ref[...],
                preferred_element_type=jnp.float32)          # (TB, A) f32
    out_ref[...] = (a + b2_ref[...]).astype(out_ref.dtype)


def linear_deep_q_forward(state, w1, b1, w2, b2, *, batch_tile=None):
    """Fused forward pass of LinearDeepQNetwork.

    state: (B, D) float        (cast to bf16 for the MXU inside)
    w1:    (D, H) float        (transposed vs. PyTorch's (H, D))
    b1:    (1, H) float32
    w2:    (H, A) float        (transposed vs. PyTorch's (A, H))
    b2:    (1, A) float32
    returns: (B, A) float32
    """
    B, D = state.shape
    H = w1.shape[1]
    A = w2.shape[1]

    # bf16 matmul operands (halves HBM traffic of the dominant operand); f32 biases.
    x = state.astype(jnp.bfloat16)
    w1b = w1.astype(jnp.bfloat16)
    w2b = w2.astype(jnp.bfloat16)
    b1f = b1.astype(jnp.float32).reshape(1, H)
    b2f = b2.astype(jnp.float32).reshape(1, A)

    tb = batch_tile if batch_tile is not None else _pick_batch_tile(B, D, H, A)
    tb = max(8, (tb // 8) * 8)
    padded_b = _round_up(max(B, 1), tb)
    if padded_b != B:
        x = jnp.pad(x, ((0, padded_b - B), (0, 0)))

    out = pl.pallas_call(
        _dqn_fwd_kernel,
        out_shape=jax.ShapeDtypeStruct((padded_b, A), jnp.float32),
        grid_spec=pl.GridSpec(
            grid=(padded_b // tb,),
            in_specs=[
                pl.BlockSpec((tb, D), lambda i: (i, 0)),   # state tile (pipelined)
                pl.BlockSpec((D, H), lambda i: (0, 0)),    # W1 (VMEM-resident)
                pl.BlockSpec((1, H), lambda i: (0, 0)),    # b1
                pl.BlockSpec((H, A), lambda i: (0, 0)),    # W2
                pl.BlockSpec((1, A), lambda i: (0, 0)),    # b2
            ],
            out_specs=pl.BlockSpec((tb, A), lambda i: (i, 0)),
        ),
        compiler_params=pltpu.CompilerParams(
            dimension_semantics=("parallel",),             # v7x: shard batch over both TCs
        ),
    )(x, w1b, b1f, w2b, b2f)
    return out[:B]


def init_params(key, input_dim, n_actions, hidden=HIDDEN):
    """Deterministic init mimicking PyTorch nn.Linear default U(-1/sqrt(fan_in), +1/sqrt(fan_in))."""
    k1, k2, k3, k4 = jax.random.split(key, 4)
    bound1 = 1.0 / jnp.sqrt(jnp.float32(input_dim))
    bound2 = 1.0 / jnp.sqrt(jnp.float32(hidden))
    w1 = jax.random.uniform(k1, (input_dim, hidden), jnp.float32, -bound1, bound1)
    b1 = jax.random.uniform(k2, (1, hidden), jnp.float32, -bound1, bound1)
    w2 = jax.random.uniform(k3, (hidden, n_actions), jnp.float32, -bound2, bound2)
    b2 = jax.random.uniform(k4, (1, n_actions), jnp.float32, -bound2, bound2)
    return w1, b1, w2, b2


if __name__ == "__main__":
    key = jax.random.PRNGKey(0)
    k_params, k_state, k_state2 = jax.random.split(key, 3)

    batch = 2
    input_dim = 8      # e.g. LinearDeepQNetwork(lr, n_actions=4, input_dims=(8,))
    n_actions = 4

    w1, b1, w2, b2 = init_params(k_params, input_dim, n_actions)
    state = jax.random.normal(k_state, (batch, input_dim), jnp.float32)

    actions = linear_deep_q_forward(state, w1, b1, w2, b2)
    actions = jax.block_until_ready(actions)
    assert actions.shape == (batch, n_actions)

    # References: one matching the kernel's bf16-input / f32-accumulate math exactly,
    # and the original f32 math with a loosened tolerance.
    def ref_bf16(x):
        xb = x.astype(jnp.bfloat16)
        h = jnp.dot(xb, w1.astype(jnp.bfloat16), preferred_element_type=jnp.float32) + b1
        h = jnp.maximum(h, 0.0)
        return jnp.dot(h.astype(jnp.bfloat16), w2.astype(jnp.bfloat16),
                       preferred_element_type=jnp.float32) + b2

    def ref_f32(x):
        return jnp.maximum(x @ w1 + b1, 0.0) @ w2 + b2

    assert jnp.allclose(actions, ref_bf16(state), atol=1e-4, rtol=1e-4)
    assert jnp.allclose(actions, ref_f32(state), atol=5e-2, rtol=5e-2)

    # Secondary check: batch not a multiple of the tile (exercises padding + batch grid).
    state2 = jax.random.normal(k_state2, (37, input_dim), jnp.float32)
    actions2 = jax.block_until_ready(
        linear_deep_q_forward(state2, w1, b1, w2, b2, batch_tile=16))
    assert actions2.shape == (37, n_actions)
    assert jnp.allclose(actions2, ref_bf16(state2), atol=1e-4, rtol=1e-4)

    print("KERNEL_OK")
</pallas_src>

<mosaic_0001>
module attributes {stable_mosaic.version = 11 : i64} {
  func.func @_dqn_fwd_kernel(%arg0: i32, %arg1: memref<8x8xbf16, #tpu.memory_space<vmem>>, %arg2: memref<8x128xbf16, #tpu.memory_space<vmem>>, %arg3: memref<1x128xf32, #tpu.memory_space<vmem>>, %arg4: memref<128x4xbf16, #tpu.memory_space<vmem>>, %arg5: memref<1x4xf32, #tpu.memory_space<vmem>>, %arg6: memref<8x4xf32, #tpu.memory_space<vmem>>) attributes {dimension_semantics = [#tpu.dimension_semantics<parallel>], iteration_bounds = array<i64: 1>, scalar_prefetch = 0 : i64, scratch_operands = 0 : i64, tpu.core_type = #tpu.core_type<tc>, window_params = [{transform_indices = @transform_0, window_bounds = array<i64: 8, 8>}, {pipeline_mode = #tpu.pipeline_mode<synchronous>, transform_indices = @transform_1, window_bounds = array<i64: 8, 128>}, {pipeline_mode = #tpu.pipeline_mode<synchronous>, transform_indices = @transform_2, window_bounds = array<i64: 1, 128>}, {pipeline_mode = #tpu.pipeline_mode<synchronous>, transform_indices = @transform_3, window_bounds = array<i64: 128, 4>}, {pipeline_mode = #tpu.pipeline_mode<synchronous>, transform_indices = @transform_4, window_bounds = array<i64: 1, 4>}, {transform_indices = @transform_5, window_bounds = array<i64: 8, 4>}]} {
    %c0 = arith.constant 0 : index
    %c0_0 = arith.constant 0 : index
    %0 = vector.load %arg1[%c0, %c0_0] : memref<8x8xbf16, #tpu.memory_space<vmem>>, vector<8x8xbf16>
    %c0_1 = arith.constant 0 : index
    %c0_2 = arith.constant 0 : index
    %1 = vector.load %arg2[%c0_1, %c0_2] : memref<8x128xbf16, #tpu.memory_space<vmem>>, vector<8x128xbf16>
    %cst = arith.constant dense<0.000000e+00> : vector<8x128xf32>
    %2 = tpu.matmul %0, %1, %cst {dimension_numbers = #tpu.dot_dimension_numbers<[1], [0], [0], [1], [0, 0, 1, 1], [], []>} : vector<8x8xbf16>, vector<8x128xbf16>, vector<8x128xf32> -> vector<8x128xf32>
    %c0_3 = arith.constant 0 : index
    %c0_4 = arith.constant 0 : index
    %3 = vector.load %arg3[%c0_3, %c0_4] : memref<1x128xf32, #tpu.memory_space<vmem>>, vector<1x128xf32>
    %4 = vector.broadcast %3 : vector<1x128xf32> to vector<8x128xf32>
    %5 = arith.addf %2, %4 : vector<8x128xf32>
    %cst_5 = arith.constant 0.000000e+00 : f32
    %6 = vector.broadcast %cst_5 : f32 to vector<8x128xf32>
    %7 = arith.maximumf %5, %6 : vector<8x128xf32>
    %8 = arith.truncf %7 : vector<8x128xf32> to vector<8x128xbf16>
    %c0_6 = arith.constant 0 : index
    %c0_7 = arith.constant 0 : index
    %9 = vector.load %arg4[%c0_6, %c0_7] : memref<128x4xbf16, #tpu.memory_space<vmem>>, vector<128x4xbf16>
    %cst_8 = arith.constant dense<0.000000e+00> : vector<8x4xf32>
    %10 = tpu.matmul %8, %9, %cst_8 {dimension_numbers = #tpu.dot_dimension_numbers<[1], [0], [0], [1], [0, 0, 1, 1], [], []>} : vector<8x128xbf16>, vector<128x4xbf16>, vector<8x4xf32> -> vector<8x4xf32>
    %c0_9 = arith.constant 0 : index
    %c0_10 = arith.constant 0 : index
    %11 = vector.load %arg5[%c0_9, %c0_10] : memref<1x4xf32, #tpu.memory_space<vmem>>, vector<1x4xf32>
    %12 = vector.broadcast %11 : vector<1x4xf32> to vector<8x4xf32>
    %13 = arith.addf %10, %12 : vector<8x4xf32>
    %c0_11 = arith.constant 0 : index
    %c0_12 = arith.constant 0 : index
    %14 = vector.load %arg6[%c0_11, %c0_12] : memref<8x4xf32, #tpu.memory_space<vmem>>, vector<8x4xf32>
    tpu.vector_store %arg6[%c0_11, %c0_12], %13 {strides = array<i32>} : memref<8x4xf32, #tpu.memory_space<vmem>>, vector<8x4xf32>,
    return
  }
  func.func @transform_0(%arg0: i32) -> (i32, i32) {
    %c0_i32 = arith.constant 0 : i32
    %c0_i32_0 = arith.constant 0 : i32
    return %arg0, %c0_i32 : i32, i32
  }
  func.func @transform_1(%arg0: i32) -> (i32, i32) {
    %c0_i32 = arith.constant 0 : i32
    %c0_i32_0 = arith.constant 0 : i32
    %c0_i32_1 = arith.constant 0 : i32
    return %c0_i32, %c0_i32_0 : i32, i32
  }
  func.func @transform_2(%arg0: i32) -> (i32, i32) {
    %c0_i32 = arith.constant 0 : i32
    %c0_i32_0 = arith.constant 0 : i32
    %c0_i32_1 = arith.constant 0 : i32
    return %c0_i32, %c0_i32_0 : i32, i32
  }
  func.func @transform_3(%arg0: i32) -> (i32, i32) {
    %c0_i32 = arith.constant 0 : i32
    %c0_i32_0 = arith.constant 0 : i32
    %c0_i32_1 = arith.constant 0 : i32
    return %c0_i32, %c0_i32_0 : i32, i32
  }
  func.func @transform_4(%arg0: i32) -> (i32, i32) {
    %c0_i32 = arith.constant 0 : i32
    %c0_i32_0 = arith.constant 0 : i32
    %c0_i32_1 = arith.constant 0 : i32
    return %c0_i32, %c0_i32_0 : i32, i32
  }
  func.func @transform_5(%arg0: i32) -> (i32, i32) {
    %c0_i32 = arith.constant 0 : i32
    %c0_i32_0 = arith.constant 0 : i32
    return %arg0, %c0_i32 : i32, i32
  }
}

</mosaic_0001>

<llo_original>
// kernel: tpu_custom_call.1
$region0: #{tpu_custom_call.1}
  #allocation0 [shape = 'u32[]', space=smem, size = 0x4, offset = 0x4, fixed_abs, tag = 'smem constant byte address 0x4 - core index']
  #allocation1 [shape = 'u32[72,128]{1,0:T(1,128)}', space=vmem, size = 0x9000, scoped, tag = 'internal scratch']
  %s0 = inlined_call_operand.vmem [shape: bf16[8,8], index: 0, kind: input, shape index: {}]
  %s1 = inlined_call_operand.vmem [shape: bf16[8,128], index: 1, kind: input, shape index: {}]
  %s2 = inlined_call_operand.vmem [shape: f32[1,128], index: 2, kind: input, shape index: {}]
  %s3 = inlined_call_operand.vmem [shape: bf16[128,4], index: 3, kind: input, shape index: {}]
  %s4 = inlined_call_operand.vmem [shape: f32[1,4], index: 4, kind: input, shape index: {}]
  %s5 = inlined_call_operand.vmem [shape: f32[8,4], index: 5, kind: output, shape index: {}]
  %s6 = sld [smem:[#allocation0]]
  $region30: #{tpu_custom_call.1} parent=0
    _
  %s8 = ssub.s32 1, %s6
  %s9 = scalar_select 0, %s8, %s6
  // Predicated region
  $region2: #{tpu_custom_call.1} parent=0 // pred_check
    _
  $region3: #{tpu_custom_call.1} parent=0 // pred_check_branch
    %11 = sbr.rel (0) target = $region5
  $region4: #{tpu_custom_call.1} parent=0 // pred_region
    _
  $region5: #{tpu_custom_call.1} parent=0 // pred_fallthru
    _
  // Predicated region
  $region6: #{tpu_custom_call.1} parent=0 // pred_check
    _
  $region7: #{tpu_custom_call.1} parent=0 // pred_check_branch
    %13 = sbr.rel (0) target = $region9
  $region8: #{tpu_custom_call.1} parent=0 // pred_region
    _
  $region9: #{tpu_custom_call.1} parent=0 // pred_fallthru
    _
  // Predicated region
  $region10: #{tpu_custom_call.1} parent=0 // pred_check
    _
  $region11: #{tpu_custom_call.1} parent=0 // pred_check_branch
    %15 = sbr.rel (0) target = $region13
  $region12: #{tpu_custom_call.1} parent=0 // pred_region
    _
  $region13: #{tpu_custom_call.1} parent=0 // pred_fallthru
    _
  // Predicated region
  $region14: #{tpu_custom_call.1} parent=0 // pred_check
    _
  $region15: #{tpu_custom_call.1} parent=0 // pred_check_branch
    %17 = sbr.rel (0) target = $region17
  $region16: #{tpu_custom_call.1} parent=0 // pred_region
    _
  $region17: #{tpu_custom_call.1} parent=0 // pred_fallthru
    _
  // Predicated region
  $region18: #{tpu_custom_call.1} parent=0 // pred_check
    _
  $region19: #{tpu_custom_call.1} parent=0 // pred_check_branch
    %19 = sbr.rel (0) target = $region21
  $region20: #{tpu_custom_call.1} parent=0 // pred_region
    _
  $region21: #{tpu_custom_call.1} parent=0 // pred_fallthru
    _
  %v21 = vld [vmem:[%s0] sm:$0xf]
  %v22 = vld [vmem:[%s1] sm:$0xf]
  %v23 = vld [vmem:[%s2] sm:$0x1]
  %v25 = vperm.slane %v23, 0
  %vm27 = vcmask 64512
  %v29 = vsel %vm27, %v21, 0
  %vm31 = vcmask 1043456
  %v33 = vsel %vm31, %v22, 0
  %35 = vmatpush.bf16.msra.mxu0 0
  %36 = vmatpush.bf16.msra.mxu0 0
  %37 = vmatpush.bf16.msra.mxu0 0
  %38 = vmatpush.bf16.msra.mxu0 0
  %39 = vmatpush.bf16.msra.mxu0 0
  %40 = vmatpush.bf16.msra.mxu0 0
  %41 = vmatpush.bf16.msra.mxu0 0
  %42 = vmatpush.bf16.msra.mxu0 %v33
  %43 = vmatmul.bf16.gmra.mxu0 %v29
  %v44 = vpop.f32.mrf.mxu0
  %v45 = vadd.f32 %v25, %v44
  %v46 = vpop.f32.mrf.mxu0
  %47 = vdwg.mxu0
  %v48 = vmax.f32 %v45, 0.0
  %v49 = vpack.c.bf16 %v48, %v48
  %v50 = vld [vmem:[%s3] sm:$0xf]
  %v51 = vld [vmem:[%s3 + $0x4] sm:$0xf]
  %v52 = vld [vmem:[%s3 + $0x8] sm:$0xf]
  %v53 = vld [vmem:[%s3 + $0xc] sm:$0xf]
  %v54 = vld [vmem:[%s3 + $0x10] sm:$0xf]
  %v55 = vld [vmem:[%s3 + $0x14] sm:$0xf]
  %v56 = vld [vmem:[%s3 + $0x18] sm:$0xf]
  %v57 = vld [vmem:[%s3 + $0x1c] sm:$0xf]
  %v58 = vld [vmem:[%s3 + $0x20] sm:$0xf]
  %v59 = vld [vmem:[%s3 + $0x24] sm:$0xf]
  %v60 = vld [vmem:[%s3 + $0x28] sm:$0xf]
  %v61 = vld [vmem:[%s3 + $0x2c] sm:$0xf]
  %v62 = vld [vmem:[%s3 + $0x30] sm:$0xf]
  %v63 = vld [vmem:[%s3 + $0x34] sm:$0xf]
  %v64 = vld [vmem:[%s3 + $0x38] sm:$0xf]
  %v65 = vld [vmem:[%s3 + $0x3c] sm:$0xf]
  %v66 = vld [vmem:[%s4] sm:$0x1]
  %v68 = vperm.slane %v66, 0
  %v86 = vunpack.c.l.b16 %v50
  %v87 = vunpack.c.l.b16 %v51
  %v88 = vunpack.c.l.b16 %v52
  %v89 = vunpack.c.l.b16 %v53
  %v90 = vunpack.c.l.b16 %v54
  %v91 = vunpack.c.l.b16 %v55
  %v92 = vunpack.c.l.b16 %v56
  %v93 = vunpack.c.l.b16 %v57
  %v94 = vunpack.c.l.b16 %v58
  %v95 = vunpack.c.l.b16 %v59
  %v96 = vunpack.c.l.b16 %v60
  %v97 = vunpack.c.l.b16 %v61
  %v98 = vunpack.c.l.b16 %v62
  %v99 = vunpack.c.l.b16 %v63
  %v100 = vunpack.c.l.b16 %v64
  %v101 = vunpack.c.l.b16 %v65
  %v102 = vpack.c.b16 %v87, %v86
  %v103 = vpack.c.b16 %v89, %v88
  %v104 = vpack.c.b16 %v91, %v90
  %v105 = vpack.c.b16 %v93, %v92
  %v106 = vpack.c.b16 %v95, %v94
  %v107 = vpack.c.b16 %v97, %v96
  %v108 = vpack.c.b16 %v99, %v98
  %v109 = vpack.c.b16 %v101, %v100
  %118 = vmatpush.bf16.msra.mxu0 %v109
  %119 = vmatpush.bf16.msra.mxu0 %v108
  %120 = vmatpush.bf16.msra.mxu0 %v107
  %121 = vmatpush.bf16.msra.mxu0 %v106
  %122 = vmatpush.bf16.msra.mxu0 %v105
  %123 = vmatpush.bf16.msra.mxu0 %v104
  %124 = vmatpush.bf16.msra.mxu0 %v103
  %125 = vmatpush.bf16.msra.mxu0 %v102
  %126 = vmatmul.bf16.gmra.mxu0 %v49
  %v127 = vpop.f32.mrf.mxu0
  %v128 = vadd.f32 %v68, %v127
  %v129 = vpop.f32.mrf.mxu0
  %130 = vdwg.mxu0
  %vm131 = vcmask 31744
  %132 = vst.msk [vmem:[%s5] sm:$0xff] %vm131, %v128
  // Predicated region
  $region22: #{tpu_custom_call.1} parent=0 // pred_check
    _
  $region23: #{tpu_custom_call.1} parent=0 // pred_check_branch
    %134 = sbr.rel (0) target = $region25
  $region24: #{tpu_custom_call.1} parent=0 // pred_region
    _
  $region25: #{tpu_custom_call.1} parent=0 // pred_fallthru
    _
  // Predicated region
  $region26: #{tpu_custom_call.1} parent=0 // pred_check
    _
  $region27: #{tpu_custom_call.1} parent=0 // pred_check_branch
    %136 = sbr.rel (0) target = $region29
  $region28: #{tpu_custom_call.1} parent=0 // pred_region
    _
  $region29: #{tpu_custom_call.1} parent=0 // pred_fallthru
    _

</llo_original>
